<compile_context>
chip_gen: v7x
topology: tpu7x:2x2x1
jax: 0.10.0
libtpu: 0.0.40
codegen_flags: <defaults>
</compile_context>

<pallas_src>
import jax
import jax.numpy as jnp
from jax.experimental import pallas as pl
from jax.experimental.pallas import tpu as pltpu

_LANES = 128
_PALLAS_MIN_ELEMS = 1024            # below ~a vreg of work, dispatch overhead dominates
_TANH_BLOCK_BYTES = 4 * 1024 * 1024  # ~4 MiB input block -> grid-step overhead <10% at v7x HBM speed
_MEAN_BLOCK_BYTES = 2 * 1024 * 1024  # per-step input block budget for the mean kernel
_TANH_VMEM_LIMIT = 40 * 1024 * 1024  # dbl-buffered in (8 MiB) + out (16 MiB) = 24 MiB; < 64 MiB v7x


def _round_up(x, m):
    return ((x + m - 1) // m) * m


# --------------------- tanh path: y = cat((x, x), 0).tanh() ---------------------
def _tanh_dup_kernel(x_ref, o_ref):
    # x_ref: (TILE, 128) ; o_ref: (2, TILE, 128) -- both concat halves of this tile.
    # tanh computed ONCE per input tile (EUP), written twice (lane-dense stores).
    t = jnp.tanh(x_ref[...]).astype(o_ref.dtype)
    o_ref[0] = t
    o_ref[1] = t


def _tanh_cat_pallas(x):
    n = x.size
    rows = pl.cdiv(n, _LANES)
    n_pad = rows * _LANES

    xf = x.reshape(-1)
    if n_pad != n:
        # TODO(synk): avoiding this full-copy pad for numel % 128 != 0 would need a
        # separate remainder kernel; 128-aligned inputs take the copy-free path.
        xf = jnp.pad(xf, (0, n_pad - n))
    x2 = xf.reshape(rows, _LANES)                       # lane-dense view

    itemsize = jnp.dtype(x.dtype).itemsize
    max_rows = max(8, (_TANH_BLOCK_BYTES // (_LANES * itemsize)) // 8 * 8)
    half_rows = max(8, _round_up(pl.cdiv(rows, 2), 8))  # keep >=2 tiles for megacore split
    tile_rows = min(max_rows, half_rows)
    num_tiles = pl.cdiv(rows, tile_rows)                # ragged last block is masked by Pallas

    out = pl.pallas_call(
        _tanh_dup_kernel,
        out_shape=jax.ShapeDtypeStruct((2, rows, _LANES), x.dtype),
        grid=(num_tiles,),
        in_specs=[pl.BlockSpec((tile_rows, _LANES), lambda i: (i, 0))],
        out_specs=pl.BlockSpec((2, tile_rows, _LANES), lambda i: (0, i, 0)),
        compiler_params=pltpu.CompilerParams(
            dimension_semantics=("parallel",),
            vmem_limit_bytes=_TANH_VMEM_LIMIT),
    )(x2)

    out_shape = (2 * x.shape[0],) + tuple(x.shape[1:])
    if n_pad == n:
        return out.reshape(out_shape)                   # no trailing slice/copy when aligned
    return out.reshape(2, n_pad)[:, :n].reshape(out_shape)


# -------------- mean path (C == 6): y = cat((x, x), 0).mean(-1).tanh() ----------
def _make_mean_tanh_kernel(inv_l):
    def kernel(x_ref, o_ref):
        # x_ref: (TILE_R, L) ; o_ref: (TILE_R, 1).
        # (TILE_R, L) @ (L, 1): big operand contracted on its lane dim (native MXU
        # orientation, no XLU transpose of the streamed block); output is tiny so
        # the narrow store is negligible.
        xf = x_ref[...].astype(jnp.float32)
        w = jnp.full((xf.shape[1], 1), inv_l, dtype=jnp.float32)
        s = jax.lax.dot_general(
            xf, w,
            dimension_numbers=(((1,), (0,)), ((), ())),
            precision=jax.lax.Precision.HIGHEST,
            preferred_element_type=jnp.float32)
        o_ref[...] = jnp.tanh(s).astype(o_ref.dtype)
    return kernel


def _mean_tanh_cat_pallas(x):
    l = x.shape[-1]
    r = x.size // l
    itemsize = jnp.dtype(x.dtype).itemsize

    budget_rows = (_MEAN_BLOCK_BYTES // max(1, l * itemsize)) // 8 * 8
    if budget_rows < 8:
        # TODO(synk): very large L needs a second grid axis over L with an f32
        # accumulator; fall back to fused XLA rather than risk VMEM OOM.
        return None

    x2 = x.reshape(r, l)                       # collapses leading dims only -> free
    tile_r = max(8, min(budget_rows, _round_up(r, 8)))
    num_tiles = pl.cdiv(r, tile_r)             # ragged last block is masked by Pallas

    out = pl.pallas_call(
        _make_mean_tanh_kernel(1.0 / l),
        out_shape=jax.ShapeDtypeStruct((r, 1), x.dtype),
        grid=(num_tiles,),
        in_specs=[pl.BlockSpec((tile_r, l), lambda i: (i, 0))],
        out_specs=pl.BlockSpec((tile_r, 1), lambda i: (i, 0)),
        compiler_params=pltpu.CompilerParams(dimension_semantics=("parallel",)),
    )(x2)

    m = out.reshape(x.shape[:-1])
    # Both concat halves are identical and tiny ((B, 6)); duplicating in the
    # wrapper is cheaper than reading the input twice.
    return jnp.concatenate([m, m], axis=0)


# -------------------------------- forward --------------------------------------
def model_forward(x):
    if x.shape[1] == 6:
        if x.size >= _PALLAS_MIN_ELEMS:
            y = _mean_tanh_cat_pallas(x)
            if y is not None:
                return y
        return jnp.tanh(jnp.mean(jnp.concatenate([x, x], axis=0), axis=-1))
    else:
        if x.size < _PALLAS_MIN_ELEMS:
            return jnp.tanh(jnp.concatenate([x, x], axis=0))
        return _tanh_cat_pallas(x)


if __name__ == "__main__":
    key = jax.random.PRNGKey(0)
    k1, k2, k3, k4, k5 = jax.random.split(key, 5)

    # 1) Original spec shape (2, 3, 4): tiny -> fused jnp fallback path.
    x_small = jax.random.normal(k1, (2, 3, 4), dtype=jnp.float32)
    y_small = jax.block_until_ready(model_forward(x_small))
    ref_small = jnp.tanh(jnp.concatenate([x_small, x_small], axis=0))
    assert y_small.shape == (4, 3, 4), y_small.shape
    assert jnp.allclose(y_small, ref_small, atol=1e-6), "small tanh path mismatch"

    # 2) 128-aligned input: copy-free tiled Pallas tanh kernel (grid of 2 row tiles).
    x_big = jax.random.normal(k2, (16, 64, 512), dtype=jnp.float32)
    y_big = jax.block_until_ready(model_forward(x_big))
    ref_big = jnp.tanh(jnp.concatenate([x_big, x_big], axis=0))
    assert y_big.shape == (32, 64, 512), y_big.shape
    assert jnp.allclose(y_big, ref_big, atol=1e-5, rtol=1e-5), "pallas tanh path mismatch"

    # 3) Unaligned size (5*7*40 = 1400): pad-to-128 + ragged last block path.
    x_rag = jax.random.normal(k3, (5, 7, 40), dtype=jnp.float32)
    y_rag = jax.block_until_ready(model_forward(x_rag))
    ref_rag = jnp.tanh(jnp.concatenate([x_rag, x_rag], axis=0))
    assert y_rag.shape == (10, 7, 40), y_rag.shape
    assert jnp.allclose(y_rag, ref_rag, atol=1e-5, rtol=1e-5), "ragged tanh path mismatch"

    # 4) C == 6 branch through the Pallas MXU mean-reduction kernel (aligned L).
    x6 = jax.random.normal(k4, (64, 6, 128), dtype=jnp.float32)
    y6 = jax.block_until_ready(model_forward(x6))
    ref6 = jnp.tanh(jnp.mean(jnp.concatenate([x6, x6], axis=0), axis=-1))
    assert y6.shape == (128, 6), y6.shape
    assert jnp.allclose(y6, ref6, atol=1e-5, rtol=1e-5), "pallas mean path mismatch"

    # 5) C == 6 branch with unaligned L and ragged row tile (no wrapper pad at all).
    x6r = jax.random.normal(k5, (35, 6, 100), dtype=jnp.float32)
    y6r = jax.block_until_ready(model_forward(x6r))
    ref6r = jnp.tanh(jnp.mean(jnp.concatenate([x6r, x6r], axis=0), axis=-1))
    assert y6r.shape == (70, 6), y6r.shape
    assert jnp.allclose(y6r, ref6r, atol=1e-5, rtol=1e-5), "ragged mean path mismatch"

    print("KERNEL_OK")
</pallas_src>

<mosaic_0001>
module attributes {stable_mosaic.version = 11 : i64} {
  func.func @_tanh_dup_kernel(%arg0: i32, %arg1: memref<2048x128xf32, #tpu.memory_space<vmem>>, %arg2: memref<2x2048x128xf32, #tpu.memory_space<vmem>>) attributes {dimension_semantics = [#tpu.dimension_semantics<parallel>], iteration_bounds = array<i64: 2>, scalar_prefetch = 0 : i64, scratch_operands = 0 : i64, tpu.core_type = #tpu.core_type<tc>, window_params = [{transform_indices = @transform_0, window_bounds = array<i64: 2048, 128>}, {transform_indices = @transform_1, window_bounds = array<i64: 2, 2048, 128>}]} {
    %c0 = arith.constant 0 : index
    %c0_0 = arith.constant 0 : index
    %0 = vector.load %arg1[%c0, %c0_0] : memref<2048x128xf32, #tpu.memory_space<vmem>>, vector<2048x128xf32>
    %1 = math.tanh %0 : vector<2048x128xf32>
    %c0_1 = arith.constant 0 : index
    %c0_2 = arith.constant 0 : index
    %c0_3 = arith.constant 0 : index
    %2 = vector.load %arg2[%c0_1, %c0_2, %c0_3] : memref<2x2048x128xf32, #tpu.memory_space<vmem>>, vector<1x2048x128xf32>
    %3 = vector.shape_cast %2 : vector<1x2048x128xf32> to vector<2048x128xf32>
    %4 = vector.shape_cast %1 : vector<2048x128xf32> to vector<1x2048x128xf32>
    tpu.vector_store %arg2[%c0_1, %c0_2, %c0_3], %4 {strides = array<i32>} : memref<2x2048x128xf32, #tpu.memory_space<vmem>>, vector<1x2048x128xf32>,
    %c1 = arith.constant 1 : index
    %c0_4 = arith.constant 0 : index
    %c0_5 = arith.constant 0 : index
    %5 = vector.load %arg2[%c1, %c0_4, %c0_5] : memref<2x2048x128xf32, #tpu.memory_space<vmem>>, vector<1x2048x128xf32>
    %6 = vector.shape_cast %5 : vector<1x2048x128xf32> to vector<2048x128xf32>
    %7 = vector.shape_cast %1 : vector<2048x128xf32> to vector<1x2048x128xf32>
    tpu.vector_store %arg2[%c1, %c0_4, %c0_5], %7 {strides = array<i32>} : memref<2x2048x128xf32, #tpu.memory_space<vmem>>, vector<1x2048x128xf32>,
    return
  }
  func.func @transform_0(%arg0: i32) -> (i32, i32) {
    %c0_i32 = arith.constant 0 : i32
    %c0_i32_0 = arith.constant 0 : i32
    return %arg0, %c0_i32 : i32, i32
  }
  func.func @transform_1(%arg0: i32) -> (i32, i32, i32) {
    %c0_i32 = arith.constant 0 : i32
    %c0_i32_0 = arith.constant 0 : i32
    %c0_i32_1 = arith.constant 0 : i32
    return %c0_i32, %arg0, %c0_i32_0 : i32, i32, i32
  }
}

</mosaic_0001>

<llo_original>
// kernel: tpu_custom_call.1
$region0: #{tpu_custom_call.1}
  #allocation0 [shape = 'u32[]', space=smem, size = 0x4, offset = 0x4, fixed_abs, tag = 'smem constant byte address 0x4 - core index']
  #allocation1 [shape = 'u32[144,128]{1,0:T(1,128)}', space=vmem, size = 0x12000, scoped, tag = 'internal scratch']
  #allocation6 [shape = 's32[]', space=sflag, size = 0x4, offset = 0, fixed_abs, tag = 'sflag constant byte address 0x0 - dummy sync flag']
  %s0 = inlined_call_operand.hbm [shape: f32[4096,128], index: 0, kind: input, shape index: {}]
  %s1 = inlined_call_operand.hbm [shape: f32[2,4096,128], index: 1, kind: output, shape index: {}]
  %s2 = sld [smem:[#allocation0]]
  $region41: #{tpu_custom_call.1} parent=0
    _
  %s4 = ssub.s32 1, %s2
  %s5 = scalar_select 0, %s4, %s2
  $region1: #{tpu_custom_call.1} parent=0
    #allocation2 [shape = 'u8[2097152]{0}', space=vmem, size = 0x200000, scoped, tag = 'input window, operand 0']
    #allocation3 [shape = 's32[2]{0}', space=sflag, size = 0x8, scoped, tag = 'scoped memory for tpu_custom_call.1']
    #allocation4 [shape = 's32[2]{0}', space=sflag, size = 0x8, scoped, tag = 'scoped memory for tpu_custom_call.1']
    #allocation5 [shape = 'u8[4194304]{0}', space=vmem, size = 0x400000, scoped, tag = 'output window, operand 0']
    %6 = vsyncpa [#allocation3], 0
    %s7 = scalar_lea.sflag [#allocation3], 1
    %8 = vsyncpa %s7, 0
    %9 = vsyncpa [#allocation4], 0
    %s10 = scalar_lea.sflag [#allocation4], 1
    %11 = vsyncpa %s10, 0
    loop: start=0, step=1, limit=4
    $region2: #{tpu_custom_call.1} parent=1 // loop_pre_header
      _
    $region3: #{tpu_custom_call.1} parent=1 // loop_header
      %s13 = sphi 0, %s17
      %p14 = scmp.ge.s32.totalorder %s13, 4
      %s23 = sphi 0, %s25
      %s26 = sphi 0, %s23
      %s27 = sphi 0, %s26
      %s43 = sphi 0, %s27
      %s49 = sphi 0, %s51
      %s52 = sphi 0, %s49
      %s53 = sphi 0, %s52
      %s69 = sphi 0, %s53
    $region4: #{tpu_custom_call.1} parent=1 // loop_header_branch
      %16 = sbr.rel (%p14) target = $region8
    $region5: #{tpu_custom_call.1} parent=1 // loop_body
      %s18 = ssub.s32 %s13, 1
      %s19 = ssub.s32 %s13, 2
      %s20 = sadd.s32 %s13, 1
      %s21 = ssub.s32 %s13, %s20
      %p22 = scmp.eq.s32.totalorder %s21, 0
      %s24 = sadd.s32 %s23, 1
      %s25 = scalar_select %p22, %s23, %s24
      %p28 = pneg %p22
      %p29 = scmp.eq.s32.totalorder %s13, 1
      %p30 = por %p28, %p29
      %p31 = scmp.ne.s32.totalorder %s23, %s26
      %p32 = scmp.eq.s32.totalorder %s13, 0
      %p33 = por %p31, %p32
      %p34 = scmp.ne.s32.totalorder %s23, %s26
      %p35 = scmp.eq.s32.totalorder %s18, 1
      %p36 = por %p34, %p35
      %p37 = scmp.ne.s32.totalorder %s26, %s27
      %p38 = scmp.eq.s32.totalorder %s18, 0
      %p39 = por %p37, %p38
      %p40 = scmp.ne.s32.totalorder %s26, %s27
      %p41 = scmp.eq.s32.totalorder %s19, 1
      %p42 = por %p40, %p41
      %p44 = scmp.ne.s32.totalorder %s27, %s43
      %p45 = scmp.eq.s32.totalorder %s19, 0
      %p46 = por %p44, %p45
      %s47 = ssub.s32 %s13, %s20
      %p48 = scmp.eq.s32.totalorder %s47, 0
      %s50 = sadd.s32 %s49, 1
      %s51 = scalar_select %p48, %s49, %s50
      %p54 = pneg %p48
      %p55 = scmp.eq.s32.totalorder %s13, 1
      %p56 = por %p54, %p55
      %p57 = scmp.ne.s32.totalorder %s49, %s52
      %p58 = scmp.eq.s32.totalorder %s13, 0
      %p59 = por %p57, %p58
      %p60 = scmp.ne.s32.totalorder %s49, %s52
      %p61 = scmp.eq.s32.totalorder %s18, 1
      %p62 = por %p60, %p61
      %p63 = scmp.ne.s32.totalorder %s52, %s53
      %p64 = scmp.eq.s32.totalorder %s18, 0
      %p65 = por %p63, %p64
      %p66 = scmp.ne.s32.totalorder %s52, %s53
      %p67 = scmp.eq.s32.totalorder %s19, 1
      %p68 = por %p66, %p67
      %p70 = scmp.ne.s32.totalorder %s53, %s69
      %p71 = scmp.eq.s32.totalorder %s19, 0
      %p72 = por %p70, %p71
      %p73 = scmp.le.s32.totalorder 1, %s13
      %p74 = scmp.lt.s32.totalorder %s13, 3
      %p75 = pnand %p73, %p74
      %p76 = pneg %p75
      // Predicated region
      $region9: #{tpu_custom_call.1} parent=5 // pred_check
        _
      $region10: #{tpu_custom_call.1} parent=5 // pred_check_branch
        %78 = sbr.rel (%p75) target = $region12
      $region11: #{tpu_custom_call.1} parent=5 // pred_region
        %s79 = ssub.s32 %s13, 1
      $region12: #{tpu_custom_call.1} parent=5 // pred_fallthru
        _
      %p80 = scmp.lt.s32.totalorder %s13, 2
      // Predicated region
      $region13: #{tpu_custom_call.1} parent=5 // pred_check
        %p81 = pneg %p80
      $region14: #{tpu_custom_call.1} parent=5 // pred_check_branch
        %83 = sbr.rel (%p81) target = $region16
      $region15: #{tpu_custom_call.1} parent=5 // pred_region
        // Predicated region
        $region17: #{tpu_custom_call.1} parent=15 // pred_check
          %p84 = pneg %p33
        $region18: #{tpu_custom_call.1} parent=15 // pred_check_branch
          %86 = sbr.rel (%p84) target = $region20
        $region19: #{tpu_custom_call.1} parent=15 // pred_region
          %s87 = sand.u32 %s23, 1
          %s88 = scalar_lea.sflag [#allocation3], %s87
          %s89 = sand.u32 %s23, 1
          %s90 = smul.addr %s89, 2048
          %s91 = scalar_lea.vmem [#allocation2], %s90
          %s92 = smul.u32 256, %s13
          %s94 = ssub.s32 32768, 32768
          %95 = vsyncadd %s88, %s94
          %s96 = smul.addr %s92, 128
          %s97 = scalar_lea.hbm %s0, %s96
          %s98 = sshll.u32 %s91, 4
          %s99 = int_to_ptr.vmem [resolvable:$true] %s98
          %104 = dma.hbm_to_vmem [thread:$0]  %s97, 32768, %s99, %s88, 128, 128, 8
        $region20: #{tpu_custom_call.1} parent=15 // pred_fallthru
          _
      $region16: #{tpu_custom_call.1} parent=5 // pred_fallthru
        _
      %p105 = scmp.le.s32.totalorder 1, %s13
      %p106 = scmp.lt.s32.totalorder %s13, 3
      %p107 = pnand %p105, %p106
      %p108 = pneg %p107
      // Predicated region
      $region21: #{tpu_custom_call.1} parent=5 // pred_check
        _
      $region22: #{tpu_custom_call.1} parent=5 // pred_check_branch
        %110 = sbr.rel (%p107) target = $region24
      $region23: #{tpu_custom_call.1} parent=5 // pred_region
        %s111 = ssub.s32 %s13, 1
        %s112 = sand.u32 %s26, 1
        %s113 = scalar_lea.sflag [#allocation3], %s112
        %s114 = sand.u32 %s26, 1
        %s115 = smul.addr %s114, 2048
        %s116 = scalar_lea.vmem [#allocation2], %s115
        // Predicated region
        $region25: #{tpu_custom_call.1} parent=23 // pred_check
          %p117 = pneg %p39
        $region26: #{tpu_custom_call.1} parent=23 // pred_check_branch
          %119 = sbr.rel (%p117) target = $region28
        $region27: #{tpu_custom_call.1} parent=23 // pred_region
          %120 = dma.done %s113, 32768
        $region28: #{tpu_custom_call.1} parent=23 // pred_fallthru
          _
        %s121 = sand.u32 %s26, 1
        %s122 = scalar_lea.sflag [#allocation3], %s121
        %s123 = sand.u32 %s26, 1
        %s124 = smul.addr %s123, 2048
        %s125 = scalar_lea.vmem [#allocation2], %s124
        %p126 = pneg %p39
        %p127 = pneg %p36
        %p128 = pneg %p65
        %p129 = pneg %p62
        %s130 = sand.u32 %s52, 1
        %s131 = scalar_lea.sflag [#allocation4], %s130
        %s132 = sand.u32 %s52, 1
        %s133 = smul.addr %s132, 4096
        %s134 = scalar_lea.vmem [#allocation5], %s133
        %s135 = smul.u32 256, %s18
        %s136 = smul.u32 256, %s18
        %v137 = vld [vmem:[%s116] sm:$0xff]
        %v138 = vld [vmem:[%s116 + $0x8] sm:$0xff]
        %v139 = vld [vmem:[%s116 + $0x10] sm:$0xff]
        %v140 = vld [vmem:[%s116 + $0x18] sm:$0xff]
        %v141 = vld [vmem:[%s116 + $0x20] sm:$0xff]
        %v142 = vld [vmem:[%s116 + $0x28] sm:$0xff]
        %v143 = vld [vmem:[%s116 + $0x30] sm:$0xff]
        %v144 = vld [vmem:[%s116 + $0x38] sm:$0xff]
        %v145 = vld [vmem:[%s116 + $0x40] sm:$0xff]
        %v146 = vld [vmem:[%s116 + $0x48] sm:$0xff]
        %v147 = vld [vmem:[%s116 + $0x50] sm:$0xff]
        %v148 = vld [vmem:[%s116 + $0x58] sm:$0xff]
        %v149 = vld [vmem:[%s116 + $0x60] sm:$0xff]
        %v150 = vld [vmem:[%s116 + $0x68] sm:$0xff]
        %v151 = vld [vmem:[%s116 + $0x70] sm:$0xff]
        %v152 = vld [vmem:[%s116 + $0x78] sm:$0xff]
        %v153 = vld [vmem:[%s116 + $0x80] sm:$0xff]
        %v154 = vld [vmem:[%s116 + $0x88] sm:$0xff]
        %v155 = vld [vmem:[%s116 + $0x90] sm:$0xff]
        %v156 = vld [vmem:[%s116 + $0x98] sm:$0xff]
        %v157 = vld [vmem:[%s116 + $0xa0] sm:$0xff]
        %v158 = vld [vmem:[%s116 + $0xa8] sm:$0xff]
        %v159 = vld [vmem:[%s116 + $0xb0] sm:$0xff]
        %v160 = vld [vmem:[%s116 + $0xb8] sm:$0xff]
        %v161 = vld [vmem:[%s116 + $0xc0] sm:$0xff]
        %v162 = vld [vmem:[%s116 + $0xc8] sm:$0xff]
        %v163 = vld [vmem:[%s116 + $0xd0] sm:$0xff]
        %v164 = vld [vmem:[%s116 + $0xd8] sm:$0xff]
        %v165 = vld [vmem:[%s116 + $0xe0] sm:$0xff]
        %v166 = vld [vmem:[%s116 + $0xe8] sm:$0xff]
        %v167 = vld [vmem:[%s116 + $0xf0] sm:$0xff]
        %v168 = vld [vmem:[%s116 + $0xf8] sm:$0xff]
        %v169 = vld [vmem:[%s116 + $0x100] sm:$0xff]
        %v170 = vld [vmem:[%s116 + $0x108] sm:$0xff]
        %v171 = vld [vmem:[%s116 + $0x110] sm:$0xff]
        %v172 = vld [vmem:[%s116 + $0x118] sm:$0xff]
        %v173 = vld [vmem:[%s116 + $0x120] sm:$0xff]
        %v174 = vld [vmem:[%s116 + $0x128] sm:$0xff]
        %v175 = vld [vmem:[%s116 + $0x130] sm:$0xff]
        %v176 = vld [vmem:[%s116 + $0x138] sm:$0xff]
        %v177 = vld [vmem:[%s116 + $0x140] sm:$0xff]
        %v178 = vld [vmem:[%s116 + $0x148] sm:$0xff]
        %v179 = vld [vmem:[%s116 + $0x150] sm:$0xff]
        %v180 = vld [vmem:[%s116 + $0x158] sm:$0xff]
        %v181 = vld [vmem:[%s116 + $0x160] sm:$0xff]
        %v182 = vld [vmem:[%s116 + $0x168] sm:$0xff]
        %v183 = vld [vmem:[%s116 + $0x170] sm:$0xff]
        %v184 = vld [vmem:[%s116 + $0x178] sm:$0xff]
        %v185 = vld [vmem:[%s116 + $0x180] sm:$0xff]
        %v186 = vld [vmem:[%s116 + $0x188] sm:$0xff]
        %v187 = vld [vmem:[%s116 + $0x190] sm:$0xff]
        %v188 = vld [vmem:[%s116 + $0x198] sm:$0xff]
        %v189 = vld [vmem:[%s116 + $0x1a0] sm:$0xff]
        %v190 = vld [vmem:[%s116 + $0x1a8] sm:$0xff]
        %v191 = vld [vmem:[%s116 + $0x1b0] sm:$0xff]
        %v192 = vld [vmem:[%s116 + $0x1b8] sm:$0xff]
        %v193 = vld [vmem:[%s116 + $0x1c0] sm:$0xff]
        %v194 = vld [vmem:[%s116 + $0x1c8] sm:$0xff]
        %v195 = vld [vmem:[%s116 + $0x1d0] sm:$0xff]
        %v196 = vld [vmem:[%s116 + $0x1d8] sm:$0xff]
        %v197 = vld [vmem:[%s116 + $0x1e0] sm:$0xff]
        %v198 = vld [vmem:[%s116 + $0x1e8] sm:$0xff]
        %v199 = vld [vmem:[%s116 + $0x1f0] sm:$0xff]
        %v200 = vld [vmem:[%s116 + $0x1f8] sm:$0xff]
        %v201 = vld [vmem:[%s116 + $0x200] sm:$0xff]
        %v202 = vld [vmem:[%s116 + $0x208] sm:$0xff]
        %v203 = vld [vmem:[%s116 + $0x210] sm:$0xff]
        %v204 = vld [vmem:[%s116 + $0x218] sm:$0xff]
        %v205 = vld [vmem:[%s116 + $0x220] sm:$0xff]
        %v206 = vld [vmem:[%s116 + $0x228] sm:$0xff]
        %v207 = vld [vmem:[%s116 + $0x230] sm:$0xff]
        %v208 = vld [vmem:[%s116 + $0x238] sm:$0xff]
        %v209 = vld [vmem:[%s116 + $0x240] sm:$0xff]
        %v210 = vld [vmem:[%s116 + $0x248] sm:$0xff]
        %v211 = vld [vmem:[%s116 + $0x250] sm:$0xff]
        %v212 = vld [vmem:[%s116 + $0x258] sm:$0xff]
        %v213 = vld [vmem:[%s116 + $0x260] sm:$0xff]
        %v214 = vld [vmem:[%s116 + $0x268] sm:$0xff]
        %v215 = vld [vmem:[%s116 + $0x270] sm:$0xff]
        %v216 = vld [vmem:[%s116 + $0x278] sm:$0xff]
        %v217 = vld [vmem:[%s116 + $0x280] sm:$0xff]
        %v218 = vld [vmem:[%s116 + $0x288] sm:$0xff]
        %v219 = vld [vmem:[%s116 + $0x290] sm:$0xff]
        %v220 = vld [vmem:[%s116 + $0x298] sm:$0xff]
        %v221 = vld [vmem:[%s116 + $0x2a0] sm:$0xff]
        %v222 = vld [vmem:[%s116 + $0x2a8] sm:$0xff]
        %v223 = vld [vmem:[%s116 + $0x2b0] sm:$0xff]
        %v224 = vld [vmem:[%s116 + $0x2b8] sm:$0xff]
        %v225 = vld [vmem:[%s116 + $0x2c0] sm:$0xff]
        %v226 = vld [vmem:[%s116 + $0x2c8] sm:$0xff]
        %v227 = vld [vmem:[%s116 + $0x2d0] sm:$0xff]
        %v228 = vld [vmem:[%s116 + $0x2d8] sm:$0xff]
        %v229 = vld [vmem:[%s116 + $0x2e0] sm:$0xff]
        %v230 = vld [vmem:[%s116 + $0x2e8] sm:$0xff]
        %v231 = vld [vmem:[%s116 + $0x2f0] sm:$0xff]
        %v232 = vld [vmem:[%s116 + $0x2f8] sm:$0xff]
        %v233 = vld [vmem:[%s116 + $0x300] sm:$0xff]
        %v234 = vld [vmem:[%s116 + $0x308] sm:$0xff]
        %v235 = vld [vmem:[%s116 + $0x310] sm:$0xff]
        %v236 = vld [vmem:[%s116 + $0x318] sm:$0xff]
        %v237 = vld [vmem:[%s116 + $0x320] sm:$0xff]
        %v238 = vld [vmem:[%s116 + $0x328] sm:$0xff]
        %v239 = vld [vmem:[%s116 + $0x330] sm:$0xff]
        %v240 = vld [vmem:[%s116 + $0x338] sm:$0xff]
        %v241 = vld [vmem:[%s116 + $0x340] sm:$0xff]
        %v242 = vld [vmem:[%s116 + $0x348] sm:$0xff]
        %v243 = vld [vmem:[%s116 + $0x350] sm:$0xff]
        %v244 = vld [vmem:[%s116 + $0x358] sm:$0xff]
        %v245 = vld [vmem:[%s116 + $0x360] sm:$0xff]
        %v246 = vld [vmem:[%s116 + $0x368] sm:$0xff]
        %v247 = vld [vmem:[%s116 + $0x370] sm:$0xff]
        %v248 = vld [vmem:[%s116 + $0x378] sm:$0xff]
        %v249 = vld [vmem:[%s116 + $0x380] sm:$0xff]
        %v250 = vld [vmem:[%s116 + $0x388] sm:$0xff]
        %v251 = vld [vmem:[%s116 + $0x390] sm:$0xff]
        %v252 = vld [vmem:[%s116 + $0x398] sm:$0xff]
        %v253 = vld [vmem:[%s116 + $0x3a0] sm:$0xff]
        %v254 = vld [vmem:[%s116 + $0x3a8] sm:$0xff]
        %v255 = vld [vmem:[%s116 + $0x3b0] sm:$0xff]
        %v256 = vld [vmem:[%s116 + $0x3b8] sm:$0xff]
        %v257 = vld [vmem:[%s116 + $0x3c0] sm:$0xff]
        %v258 = vld [vmem:[%s116 + $0x3c8] sm:$0xff]
        %v259 = vld [vmem:[%s116 + $0x3d0] sm:$0xff]
        %v260 = vld [vmem:[%s116 + $0x3d8] sm:$0xff]
        %v261 = vld [vmem:[%s116 + $0x3e0] sm:$0xff]
        %v262 = vld [vmem:[%s116 + $0x3e8] sm:$0xff]
        %v263 = vld [vmem:[%s116 + $0x3f0] sm:$0xff]
        %v264 = vld [vmem:[%s116 + $0x3f8] sm:$0xff]
        %v265 = vld [vmem:[%s116 + $0x400] sm:$0xff]
        %v266 = vld [vmem:[%s116 + $0x408] sm:$0xff]
        %v267 = vld [vmem:[%s116 + $0x410] sm:$0xff]
        %v268 = vld [vmem:[%s116 + $0x418] sm:$0xff]
        %v269 = vld [vmem:[%s116 + $0x420] sm:$0xff]
        %v270 = vld [vmem:[%s116 + $0x428] sm:$0xff]
        %v271 = vld [vmem:[%s116 + $0x430] sm:$0xff]
        %v272 = vld [vmem:[%s116 + $0x438] sm:$0xff]
        %v273 = vld [vmem:[%s116 + $0x440] sm:$0xff]
        %v274 = vld [vmem:[%s116 + $0x448] sm:$0xff]
        %v275 = vld [vmem:[%s116 + $0x450] sm:$0xff]
        %v276 = vld [vmem:[%s116 + $0x458] sm:$0xff]
        %v277 = vld [vmem:[%s116 + $0x460] sm:$0xff]
        %v278 = vld [vmem:[%s116 + $0x468] sm:$0xff]
        %v279 = vld [vmem:[%s116 + $0x470] sm:$0xff]
        %v280 = vld [vmem:[%s116 + $0x478] sm:$0xff]
        %v281 = vld [vmem:[%s116 + $0x480] sm:$0xff]
        %v282 = vld [vmem:[%s116 + $0x488] sm:$0xff]
        %v283 = vld [vmem:[%s116 + $0x490] sm:$0xff]
        %v284 = vld [vmem:[%s116 + $0x498] sm:$0xff]
        %v285 = vld [vmem:[%s116 + $0x4a0] sm:$0xff]
        %v286 = vld [vmem:[%s116 + $0x4a8] sm:$0xff]
        %v287 = vld [vmem:[%s116 + $0x4b0] sm:$0xff]
        %v288 = vld [vmem:[%s116 + $0x4b8] sm:$0xff]
        %v289 = vld [vmem:[%s116 + $0x4c0] sm:$0xff]
        %v290 = vld [vmem:[%s116 + $0x4c8] sm:$0xff]
        %v291 = vld [vmem:[%s116 + $0x4d0] sm:$0xff]
        %v292 = vld [vmem:[%s116 + $0x4d8] sm:$0xff]
        %v293 = vld [vmem:[%s116 + $0x4e0] sm:$0xff]
        %v294 = vld [vmem:[%s116 + $0x4e8] sm:$0xff]
        %v295 = vld [vmem:[%s116 + $0x4f0] sm:$0xff]
        %v296 = vld [vmem:[%s116 + $0x4f8] sm:$0xff]
        %v297 = vld [vmem:[%s116 + $0x500] sm:$0xff]
        %v298 = vld [vmem:[%s116 + $0x508] sm:$0xff]
        %v299 = vld [vmem:[%s116 + $0x510] sm:$0xff]
        %v300 = vld [vmem:[%s116 + $0x518] sm:$0xff]
        %v301 = vld [vmem:[%s116 + $0x520] sm:$0xff]
        %v302 = vld [vmem:[%s116 + $0x528] sm:$0xff]
        %v303 = vld [vmem:[%s116 + $0x530] sm:$0xff]
        %v304 = vld [vmem:[%s116 + $0x538] sm:$0xff]
        %v305 = vld [vmem:[%s116 + $0x540] sm:$0xff]
        %v306 = vld [vmem:[%s116 + $0x548] sm:$0xff]
        %v307 = vld [vmem:[%s116 + $0x550] sm:$0xff]
        %v308 = vld [vmem:[%s116 + $0x558] sm:$0xff]
        %v309 = vld [vmem:[%s116 + $0x560] sm:$0xff]
        %v310 = vld [vmem:[%s116 + $0x568] sm:$0xff]
        %v311 = vld [vmem:[%s116 + $0x570] sm:$0xff]
        %v312 = vld [vmem:[%s116 + $0x578] sm:$0xff]
        %v313 = vld [vmem:[%s116 + $0x580] sm:$0xff]
        %v314 = vld [vmem:[%s116 + $0x588] sm:$0xff]
        %v315 = vld [vmem:[%s116 + $0x590] sm:$0xff]
        %v316 = vld [vmem:[%s116 + $0x598] sm:$0xff]
        %v317 = vld [vmem:[%s116 + $0x5a0] sm:$0xff]
        %v318 = vld [vmem:[%s116 + $0x5a8] sm:$0xff]
        %v319 = vld [vmem:[%s116 + $0x5b0] sm:$0xff]
        %v320 = vld [vmem:[%s116 + $0x5b8] sm:$0xff]
        %v321 = vld [vmem:[%s116 + $0x5c0] sm:$0xff]
        %v322 = vld [vmem:[%s116 + $0x5c8] sm:$0xff]
        %v323 = vld [vmem:[%s116 + $0x5d0] sm:$0xff]
        %v324 = vld [vmem:[%s116 + $0x5d8] sm:$0xff]
        %v325 = vld [vmem:[%s116 + $0x5e0] sm:$0xff]
        %v326 = vld [vmem:[%s116 + $0x5e8] sm:$0xff]
        %v327 = vld [vmem:[%s116 + $0x5f0] sm:$0xff]
        %v328 = vld [vmem:[%s116 + $0x5f8] sm:$0xff]
        %v329 = vld [vmem:[%s116 + $0x600] sm:$0xff]
        %v330 = vld [vmem:[%s116 + $0x608] sm:$0xff]
        %v331 = vld [vmem:[%s116 + $0x610] sm:$0xff]
        %v332 = vld [vmem:[%s116 + $0x618] sm:$0xff]
        %v333 = vld [vmem:[%s116 + $0x620] sm:$0xff]
        %v334 = vld [vmem:[%s116 + $0x628] sm:$0xff]
        %v335 = vld [vmem:[%s116 + $0x630] sm:$0xff]
        %v336 = vld [vmem:[%s116 + $0x638] sm:$0xff]
        %v337 = vld [vmem:[%s116 + $0x640] sm:$0xff]
        %v338 = vld [vmem:[%s116 + $0x648] sm:$0xff]
        %v339 = vld [vmem:[%s116 + $0x650] sm:$0xff]
        %v340 = vld [vmem:[%s116 + $0x658] sm:$0xff]
        %v341 = vld [vmem:[%s116 + $0x660] sm:$0xff]
        %v342 = vld [vmem:[%s116 + $0x668] sm:$0xff]
        %v343 = vld [vmem:[%s116 + $0x670] sm:$0xff]
        %v344 = vld [vmem:[%s116 + $0x678] sm:$0xff]
        %v345 = vld [vmem:[%s116 + $0x680] sm:$0xff]
        %v346 = vld [vmem:[%s116 + $0x688] sm:$0xff]
        %v347 = vld [vmem:[%s116 + $0x690] sm:$0xff]
        %v348 = vld [vmem:[%s116 + $0x698] sm:$0xff]
        %v349 = vld [vmem:[%s116 + $0x6a0] sm:$0xff]
        %v350 = vld [vmem:[%s116 + $0x6a8] sm:$0xff]
        %v351 = vld [vmem:[%s116 + $0x6b0] sm:$0xff]
        %v352 = vld [vmem:[%s116 + $0x6b8] sm:$0xff]
        %v353 = vld [vmem:[%s116 + $0x6c0] sm:$0xff]
        %v354 = vld [vmem:[%s116 + $0x6c8] sm:$0xff]
        %v355 = vld [vmem:[%s116 + $0x6d0] sm:$0xff]
        %v356 = vld [vmem:[%s116 + $0x6d8] sm:$0xff]
        %v357 = vld [vmem:[%s116 + $0x6e0] sm:$0xff]
        %v358 = vld [vmem:[%s116 + $0x6e8] sm:$0xff]
        %v359 = vld [vmem:[%s116 + $0x6f0] sm:$0xff]
        %v360 = vld [vmem:[%s116 + $0x6f8] sm:$0xff]
        %v361 = vld [vmem:[%s116 + $0x700] sm:$0xff]
        %v362 = vld [vmem:[%s116 + $0x708] sm:$0xff]
        %v363 = vld [vmem:[%s116 + $0x710] sm:$0xff]
        %v364 = vld [vmem:[%s116 + $0x718] sm:$0xff]
        %v365 = vld [vmem:[%s116 + $0x720] sm:$0xff]
        %v366 = vld [vmem:[%s116 + $0x728] sm:$0xff]
        %v367 = vld [vmem:[%s116 + $0x730] sm:$0xff]
        %v368 = vld [vmem:[%s116 + $0x738] sm:$0xff]
        %v369 = vld [vmem:[%s116 + $0x740] sm:$0xff]
        %v370 = vld [vmem:[%s116 + $0x748] sm:$0xff]
        %v371 = vld [vmem:[%s116 + $0x750] sm:$0xff]
        %v372 = vld [vmem:[%s116 + $0x758] sm:$0xff]
        %v373 = vld [vmem:[%s116 + $0x760] sm:$0xff]
        %v374 = vld [vmem:[%s116 + $0x768] sm:$0xff]
        %v375 = vld [vmem:[%s116 + $0x770] sm:$0xff]
        %v376 = vld [vmem:[%s116 + $0x778] sm:$0xff]
        %v377 = vld [vmem:[%s116 + $0x780] sm:$0xff]
        %v378 = vld [vmem:[%s116 + $0x788] sm:$0xff]
        %v379 = vld [vmem:[%s116 + $0x790] sm:$0xff]
        %v380 = vld [vmem:[%s116 + $0x798] sm:$0xff]
        %v381 = vld [vmem:[%s116 + $0x7a0] sm:$0xff]
        %v382 = vld [vmem:[%s116 + $0x7a8] sm:$0xff]
        %v383 = vld [vmem:[%s116 + $0x7b0] sm:$0xff]
        %v384 = vld [vmem:[%s116 + $0x7b8] sm:$0xff]
        %v385 = vld [vmem:[%s116 + $0x7c0] sm:$0xff]
        %v386 = vld [vmem:[%s116 + $0x7c8] sm:$0xff]
        %v387 = vld [vmem:[%s116 + $0x7d0] sm:$0xff]
        %v388 = vld [vmem:[%s116 + $0x7d8] sm:$0xff]
        %v389 = vld [vmem:[%s116 + $0x7e0] sm:$0xff]
        %v390 = vld [vmem:[%s116 + $0x7e8] sm:$0xff]
        %v391 = vld [vmem:[%s116 + $0x7f0] sm:$0xff]
        %v392 = vld [vmem:[%s116 + $0x7f8] sm:$0xff]
        %v393 = vtanh.pop %v137
        %v394 = vtanh.pop %v138
        %v395 = vtanh.pop %v139
        %v396 = vtanh.pop %v140
        %v397 = vtanh.pop %v141
        %v398 = vtanh.pop %v142
        %v399 = vtanh.pop %v143
        %v400 = vtanh.pop %v144
        %v401 = vtanh.pop %v145
        %v402 = vtanh.pop %v146
        %v403 = vtanh.pop %v147
        %v404 = vtanh.pop %v148
        %v405 = vtanh.pop %v149
        %v406 = vtanh.pop %v150
        %v407 = vtanh.pop %v151
        %v408 = vtanh.pop %v152
        %v409 = vtanh.pop %v153
        %v410 = vtanh.pop %v154
        %v411 = vtanh.pop %v155
        %v412 = vtanh.pop %v156
        %v413 = vtanh.pop %v157
        %v414 = vtanh.pop %v158
        %v415 = vtanh.pop %v159
        %v416 = vtanh.pop %v160
        %v417 = vtanh.pop %v161
        %v418 = vtanh.pop %v162
        %v419 = vtanh.pop %v163
        %v420 = vtanh.pop %v164
        %v421 = vtanh.pop %v165
        %v422 = vtanh.pop %v166
        %v423 = vtanh.pop %v167
        %v424 = vtanh.pop %v168
        %v425 = vtanh.pop %v169
        %v426 = vtanh.pop %v170
        %v427 = vtanh.pop %v171
        %v428 = vtanh.pop %v172
        %v429 = vtanh.pop %v173
        %v430 = vtanh.pop %v174
        %v431 = vtanh.pop %v175
        %v432 = vtanh.pop %v176
        %v433 = vtanh.pop %v177
        %v434 = vtanh.pop %v178
        %v435 = vtanh.pop %v179
        %v436 = vtanh.pop %v180
        %v437 = vtanh.pop %v181
        %v438 = vtanh.pop %v182
        %v439 = vtanh.pop %v183
        %v440 = vtanh.pop %v184
        %v441 = vtanh.pop %v185
        %v442 = vtanh.pop %v186
        %v443 = vtanh.pop %v187
        %v444 = vtanh.pop %v188
        %v445 = vtanh.pop %v189
        %v446 = vtanh.pop %v190
        %v447 = vtanh.pop %v191
        %v448 = vtanh.pop %v192
        %v449 = vtanh.pop %v193
        %v450 = vtanh.pop %v194
        %v451 = vtanh.pop %v195
        %v452 = vtanh.pop %v196
        %v453 = vtanh.pop %v197
        %v454 = vtanh.pop %v198
        %v455 = vtanh.pop %v199
        %v456 = vtanh.pop %v200
        %v457 = vtanh.pop %v201
        %v458 = vtanh.pop %v202
        %v459 = vtanh.pop %v203
        %v460 = vtanh.pop %v204
        %v461 = vtanh.pop %v205
        %v462 = vtanh.pop %v206
        %v463 = vtanh.pop %v207
        %v464 = vtanh.pop %v208
        %v465 = vtanh.pop %v209
        %v466 = vtanh.pop %v210
        %v467 = vtanh.pop %v211
        %v468 = vtanh.pop %v212
        %v469 = vtanh.pop %v213
        %v470 = vtanh.pop %v214
        %v471 = vtanh.pop %v215
        %v472 = vtanh.pop %v216
        %v473 = vtanh.pop %v217
        %v474 = vtanh.pop %v218
        %v475 = vtanh.pop %v219
        %v476 = vtanh.pop %v220
        %v477 = vtanh.pop %v221
        %v478 = vtanh.pop %v222
        %v479 = vtanh.pop %v223
        %v480 = vtanh.pop %v224
        %v481 = vtanh.pop %v225
        %v482 = vtanh.pop %v226
        %v483 = vtanh.pop %v227
        %v484 = vtanh.pop %v228
        %v485 = vtanh.pop %v229
        %v486 = vtanh.pop %v230
        %v487 = vtanh.pop %v231
        %v488 = vtanh.pop %v232
        %v489 = vtanh.pop %v233
        %v490 = vtanh.pop %v234
        %v491 = vtanh.pop %v235
        %v492 = vtanh.pop %v236
        %v493 = vtanh.pop %v237
        %v494 = vtanh.pop %v238
        %v495 = vtanh.pop %v239
        %v496 = vtanh.pop %v240
        %v497 = vtanh.pop %v241
        %v498 = vtanh.pop %v242
        %v499 = vtanh.pop %v243
        %v500 = vtanh.pop %v244
        %v501 = vtanh.pop %v245
        %v502 = vtanh.pop %v246
        %v503 = vtanh.pop %v247
        %v504 = vtanh.pop %v248
        %v505 = vtanh.pop %v249
        %v506 = vtanh.pop %v250
        %v507 = vtanh.pop %v251
        %v508 = vtanh.pop %v252
        %v509 = vtanh.pop %v253
        %v510 = vtanh.pop %v254
        %v511 = vtanh.pop %v255
        %v512 = vtanh.pop %v256
        %v513 = vtanh.pop %v257
        %v514 = vtanh.pop %v258
        %v515 = vtanh.pop %v259
        %v516 = vtanh.pop %v260
        %v517 = vtanh.pop %v261
        %v518 = vtanh.pop %v262
        %v519 = vtanh.pop %v263
        %v520 = vtanh.pop %v264
        %v521 = vtanh.pop %v265
        %v522 = vtanh.pop %v266
        %v523 = vtanh.pop %v267
        %v524 = vtanh.pop %v268
        %v525 = vtanh.pop %v269
        %v526 = vtanh.pop %v270
        %v527 = vtanh.pop %v271
        %v528 = vtanh.pop %v272
        %v529 = vtanh.pop %v273
        %v530 = vtanh.pop %v274
        %v531 = vtanh.pop %v275
        %v532 = vtanh.pop %v276
        %v533 = vtanh.pop %v277
        %v534 = vtanh.pop %v278
        %v535 = vtanh.pop %v279
        %v536 = vtanh.pop %v280
        %v537 = vtanh.pop %v281
        %v538 = vtanh.pop %v282
        %v539 = vtanh.pop %v283
        %v540 = vtanh.pop %v284
        %v541 = vtanh.pop %v285
        %v542 = vtanh.pop %v286
        %v543 = vtanh.pop %v287
        %v544 = vtanh.pop %v288
        %v545 = vtanh.pop %v289
        %v546 = vtanh.pop %v290
        %v547 = vtanh.pop %v291
        %v548 = vtanh.pop %v292
        %v549 = vtanh.pop %v293
        %v550 = vtanh.pop %v294
        %v551 = vtanh.pop %v295
        %v552 = vtanh.pop %v296
        %v553 = vtanh.pop %v297
        %v554 = vtanh.pop %v298
        %v555 = vtanh.pop %v299
        %v556 = vtanh.pop %v300
        %v557 = vtanh.pop %v301
        %v558 = vtanh.pop %v302
        %v559 = vtanh.pop %v303
        %v560 = vtanh.pop %v304
        %v561 = vtanh.pop %v305
        %v562 = vtanh.pop %v306
        %v563 = vtanh.pop %v307
        %v564 = vtanh.pop %v308
        %v565 = vtanh.pop %v309
        %v566 = vtanh.pop %v310
        %v567 = vtanh.pop %v311
        %v568 = vtanh.pop %v312
        %v569 = vtanh.pop %v313
        %v570 = vtanh.pop %v314
        %v571 = vtanh.pop %v315
        %v572 = vtanh.pop %v316
        %v573 = vtanh.pop %v317
        %v574 = vtanh.pop %v318
        %v575 = vtanh.pop %v319
        %v576 = vtanh.pop %v320
        %v577 = vtanh.pop %v321
        %v578 = vtanh.pop %v322
        %v579 = vtanh.pop %v323
        %v580 = vtanh.pop %v324
        %v581 = vtanh.pop %v325
        %v582 = vtanh.pop %v326
        %v583 = vtanh.pop %v327
        %v584 = vtanh.pop %v328
        %v585 = vtanh.pop %v329
        %v586 = vtanh.pop %v330
        %v587 = vtanh.pop %v331
        %v588 = vtanh.pop %v332
        %v589 = vtanh.pop %v333
        %v590 = vtanh.pop %v334
        %v591 = vtanh.pop %v335
        %v592 = vtanh.pop %v336
        %v593 = vtanh.pop %v337
        %v594 = vtanh.pop %v338
        %v595 = vtanh.pop %v339
        %v596 = vtanh.pop %v340
        %v597 = vtanh.pop %v341
        %v598 = vtanh.pop %v342
        %v599 = vtanh.pop %v343
        %v600 = vtanh.pop %v344
        %v601 = vtanh.pop %v345
        %v602 = vtanh.pop %v346
        %v603 = vtanh.pop %v347
        %v604 = vtanh.pop %v348
        %v605 = vtanh.pop %v349
        %v606 = vtanh.pop %v350
        %v607 = vtanh.pop %v351
        %v608 = vtanh.pop %v352
        %v609 = vtanh.pop %v353
        %v610 = vtanh.pop %v354
        %v611 = vtanh.pop %v355
        %v612 = vtanh.pop %v356
        %v613 = vtanh.pop %v357
        %v614 = vtanh.pop %v358
        %v615 = vtanh.pop %v359
        %v616 = vtanh.pop %v360
        %v617 = vtanh.pop %v361
        %v618 = vtanh.pop %v362
        %v619 = vtanh.pop %v363
        %v620 = vtanh.pop %v364
        %v621 = vtanh.pop %v365
        %v622 = vtanh.pop %v366
        %v623 = vtanh.pop %v367
        %v624 = vtanh.pop %v368
        %v625 = vtanh.pop %v369
        %v626 = vtanh.pop %v370
        %v627 = vtanh.pop %v371
        %v628 = vtanh.pop %v372
        %v629 = vtanh.pop %v373
        %v630 = vtanh.pop %v374
        %v631 = vtanh.pop %v375
        %v632 = vtanh.pop %v376
        %v633 = vtanh.pop %v377
        %v634 = vtanh.pop %v378
        %v635 = vtanh.pop %v379
        %v636 = vtanh.pop %v380
        %v637 = vtanh.pop %v381
        %v638 = vtanh.pop %v382
        %v639 = vtanh.pop %v383
        %v640 = vtanh.pop %v384
        %v641 = vtanh.pop %v385
        %v642 = vtanh.pop %v386
        %v643 = vtanh.pop %v387
        %v644 = vtanh.pop %v388
        %v645 = vtanh.pop %v389
        %v646 = vtanh.pop %v390
        %v647 = vtanh.pop %v391
        %v648 = vtanh.pop %v392
        %649 = vst [vmem:[%s134] sm:$0xff] %v393
        %650 = vst [vmem:[%s134 + $0x8] sm:$0xff] %v394
        %651 = vst [vmem:[%s134 + $0x10] sm:$0xff] %v395
        %652 = vst [vmem:[%s134 + $0x18] sm:$0xff] %v396
        %653 = vst [vmem:[%s134 + $0x20] sm:$0xff] %v397
        %654 = vst [vmem:[%s134 + $0x28] sm:$0xff] %v398
        %655 = vst [vmem:[%s134 + $0x30] sm:$0xff] %v399
        %656 = vst [vmem:[%s134 + $0x38] sm:$0xff] %v400
        %657 = vst [vmem:[%s134 + $0x40] sm:$0xff] %v401
        %658 = vst [vmem:[%s134 + $0x48] sm:$0xff] %v402
        %659 = vst [vmem:[%s134 + $0x50] sm:$0xff] %v403
        %660 = vst [vmem:[%s134 + $0x58] sm:$0xff] %v404
        %661 = vst [vmem:[%s134 + $0x60] sm:$0xff] %v405
        %662 = vst [vmem:[%s134 + $0x68] sm:$0xff] %v406
        %663 = vst [vmem:[%s134 + $0x70] sm:$0xff] %v407
        %664 = vst [vmem:[%s134 + $0x78] sm:$0xff] %v408
        %665 = vst [vmem:[%s134 + $0x80] sm:$0xff] %v409
        %666 = vst [vmem:[%s134 + $0x88] sm:$0xff] %v410
        %667 = vst [vmem:[%s134 + $0x90] sm:$0xff] %v411
        %668 = vst [vmem:[%s134 + $0x98] sm:$0xff] %v412
        %669 = vst [vmem:[%s134 + $0xa0] sm:$0xff] %v413
        %670 = vst [vmem:[%s134 + $0xa8] sm:$0xff] %v414
        %671 = vst [vmem:[%s134 + $0xb0] sm:$0xff] %v415
        %672 = vst [vmem:[%s134 + $0xb8] sm:$0xff] %v416
        %673 = vst [vmem:[%s134 + $0xc0] sm:$0xff] %v417
        %674 = vst [vmem:[%s134 + $0xc8] sm:$0xff] %v418
        %675 = vst [vmem:[%s134 + $0xd0] sm:$0xff] %v419
        %676 = vst [vmem:[%s134 + $0xd8] sm:$0xff] %v420
        %677 = vst [vmem:[%s134 + $0xe0] sm:$0xff] %v421
        %678 = vst [vmem:[%s134 + $0xe8] sm:$0xff] %v422
        %679 = vst [vmem:[%s134 + $0xf0] sm:$0xff] %v423
        %680 = vst [vmem:[%s134 + $0xf8] sm:$0xff] %v424
        %681 = vst [vmem:[%s134 + $0x100] sm:$0xff] %v425
        %682 = vst [vmem:[%s134 + $0x108] sm:$0xff] %v426
        %683 = vst [vmem:[%s134 + $0x110] sm:$0xff] %v427
        %684 = vst [vmem:[%s134 + $0x118] sm:$0xff] %v428
        %685 = vst [vmem:[%s134 + $0x120] sm:$0xff] %v429
        %686 = vst [vmem:[%s134 + $0x128] sm:$0xff] %v430
        %687 = vst [vmem:[%s134 + $0x130] sm:$0xff] %v431
        %688 = vst [vmem:[%s134 + $0x138] sm:$0xff] %v432
        %689 = vst [vmem:[%s134 + $0x140] sm:$0xff] %v433
        %690 = vst [vmem:[%s134 + $0x148] sm:$0xff] %v434
        %691 = vst [vmem:[%s134 + $0x150] sm:$0xff] %v435
        %692 = vst [vmem:[%s134 + $0x158] sm:$0xff] %v436
        %693 = vst [vmem:[%s134 + $0x160] sm:$0xff] %v437
        %694 = vst [vmem:[%s134 + $0x168] sm:$0xff] %v438
        %695 = vst [vmem:[%s134 + $0x170] sm:$0xff] %v439
        %696 = vst [vmem:[%s134 + $0x178] sm:$0xff] %v440
        %697 = vst [vmem:[%s134 + $0x180] sm:$0xff] %v441
        %698 = vst [vmem:[%s134 + $0x188] sm:$0xff] %v442
        %699 = vst [vmem:[%s134 + $0x190] sm:$0xff] %v443
        %700 = vst [vmem:[%s134 + $0x198] sm:$0xff] %v444
        %701 = vst [vmem:[%s134 + $0x1a0] sm:$0xff] %v445
        %702 = vst [vmem:[%s134 + $0x1a8] sm:$0xff] %v446
        %703 = vst [vmem:[%s134 + $0x1b0] sm:$0xff] %v447
        %704 = vst [vmem:[%s134 + $0x1b8] sm:$0xff] %v448
        %705 = vst [vmem:[%s134 + $0x1c0] sm:$0xff] %v449
        %706 = vst [vmem:[%s134 + $0x1c8] sm:$0xff] %v450
        %707 = vst [vmem:[%s134 + $0x1d0] sm:$0xff] %v451
        %708 = vst [vmem:[%s134 + $0x1d8] sm:$0xff] %v452
        %709 = vst [vmem:[%s134 + $0x1e0] sm:$0xff] %v453
        %710 = vst [vmem:[%s134 + $0x1e8] sm:$0xff] %v454
        %711 = vst [vmem:[%s134 + $0x1f0] sm:$0xff] %v455
        %712 = vst [vmem:[%s134 + $0x1f8] sm:$0xff] %v456
        %713 = vst [vmem:[%s134 + $0x200] sm:$0xff] %v457
        %714 = vst [vmem:[%s134 + $0x208] sm:$0xff] %v458
        %715 = vst [vmem:[%s134 + $0x210] sm:$0xff] %v459
        %716 = vst [vmem:[%s134 + $0x218] sm:$0xff] %v460
        %717 = vst [vmem:[%s134 + $0x220] sm:$0xff] %v461
        %718 = vst [vmem:[%s134 + $0x228] sm:$0xff] %v462
        %719 = vst [vmem:[%s134 + $0x230] sm:$0xff] %v463
        %720 = vst [vmem:[%s134 + $0x238] sm:$0xff] %v464
        %721 = vst [vmem:[%s134 + $0x240] sm:$0xff] %v465
        %722 = vst [vmem:[%s134 + $0x248] sm:$0xff] %v466
        %723 = vst [vmem:[%s134 + $0x250] sm:$0xff] %v467
        %724 = vst [vmem:[%s134 + $0x258] sm:$0xff] %v468
        %725 = vst [vmem:[%s134 + $0x260] sm:$0xff] %v469
        %726 = vst [vmem:[%s134 + $0x268] sm:$0xff] %v470
        %727 = vst [vmem:[%s134 + $0x270] sm:$0xff] %v471
        %728 = vst [vmem:[%s134 + $0x278] sm:$0xff] %v472
        %729 = vst [vmem:[%s134 + $0x280] sm:$0xff] %v473
        %730 = vst [vmem:[%s134 + $0x288] sm:$0xff] %v474
        %731 = vst [vmem:[%s134 + $0x290] sm:$0xff] %v475
        %732 = vst [vmem:[%s134 + $0x298] sm:$0xff] %v476
        %733 = vst [vmem:[%s134 + $0x2a0] sm:$0xff] %v477
        %734 = vst [vmem:[%s134 + $0x2a8] sm:$0xff] %v478
        %735 = vst [vmem:[%s134 + $0x2b0] sm:$0xff] %v479
        %736 = vst [vmem:[%s134 + $0x2b8] sm:$0xff] %v480
        %737 = vst [vmem:[%s134 + $0x2c0] sm:$0xff] %v481
        %738 = vst [vmem:[%s134 + $0x2c8] sm:$0xff] %v482
        %739 = vst [vmem:[%s134 + $0x2d0] sm:$0xff] %v483
        %740 = vst [vmem:[%s134 + $0x2d8] sm:$0xff] %v484
        %741 = vst [vmem:[%s134 + $0x2e0] sm:$0xff] %v485
        %742 = vst [vmem:[%s134 + $0x2e8] sm:$0xff] %v486
        %743 = vst [vmem:[%s134 + $0x2f0] sm:$0xff] %v487
        %744 = vst [vmem:[%s134 + $0x2f8] sm:$0xff] %v488
        %745 = vst [vmem:[%s134 + $0x300] sm:$0xff] %v489
        %746 = vst [vmem:[%s134 + $0x308] sm:$0xff] %v490
        %747 = vst [vmem:[%s134 + $0x310] sm:$0xff] %v491
        %748 = vst [vmem:[%s134 + $0x318] sm:$0xff] %v492
        %749 = vst [vmem:[%s134 + $0x320] sm:$0xff] %v493
        %750 = vst [vmem:[%s134 + $0x328] sm:$0xff] %v494
        %751 = vst [vmem:[%s134 + $0x330] sm:$0xff] %v495
        %752 = vst [vmem:[%s134 + $0x338] sm:$0xff] %v496
        %753 = vst [vmem:[%s134 + $0x340] sm:$0xff] %v497
        %754 = vst [vmem:[%s134 + $0x348] sm:$0xff] %v498
        %755 = vst [vmem:[%s134 + $0x350] sm:$0xff] %v499
        %756 = vst [vmem:[%s134 + $0x358] sm:$0xff] %v500
        %757 = vst [vmem:[%s134 + $0x360] sm:$0xff] %v501
        %758 = vst [vmem:[%s134 + $0x368] sm:$0xff] %v502
        %759 = vst [vmem:[%s134 + $0x370] sm:$0xff] %v503
        %760 = vst [vmem:[%s134 + $0x378] sm:$0xff] %v504
        %761 = vst [vmem:[%s134 + $0x380] sm:$0xff] %v505
        %762 = vst [vmem:[%s134 + $0x388] sm:$0xff] %v506
        %763 = vst [vmem:[%s134 + $0x390] sm:$0xff] %v507
        %764 = vst [vmem:[%s134 + $0x398] sm:$0xff] %v508
        %765 = vst [vmem:[%s134 + $0x3a0] sm:$0xff] %v509
        %766 = vst [vmem:[%s134 + $0x3a8] sm:$0xff] %v510
        %767 = vst [vmem:[%s134 + $0x3b0] sm:$0xff] %v511
        %768 = vst [vmem:[%s134 + $0x3b8] sm:$0xff] %v512
        %769 = vst [vmem:[%s134 + $0x3c0] sm:$0xff] %v513
        %770 = vst [vmem:[%s134 + $0x3c8] sm:$0xff] %v514
        %771 = vst [vmem:[%s134 + $0x3d0] sm:$0xff] %v515
        %772 = vst [vmem:[%s134 + $0x3d8] sm:$0xff] %v516
        %773 = vst [vmem:[%s134 + $0x3e0] sm:$0xff] %v517
        %774 = vst [vmem:[%s134 + $0x3e8] sm:$0xff] %v518
        %775 = vst [vmem:[%s134 + $0x3f0] sm:$0xff] %v519
        %776 = vst [vmem:[%s134 + $0x3f8] sm:$0xff] %v520
        %777 = vst [vmem:[%s134 + $0x400] sm:$0xff] %v521
        %778 = vst [vmem:[%s134 + $0x408] sm:$0xff] %v522
        %779 = vst [vmem:[%s134 + $0x410] sm:$0xff] %v523
        %780 = vst [vmem:[%s134 + $0x418] sm:$0xff] %v524
        %781 = vst [vmem:[%s134 + $0x420] sm:$0xff] %v525
        %782 = vst [vmem:[%s134 + $0x428] sm:$0xff] %v526
        %783 = vst [vmem:[%s134 + $0x430] sm:$0xff] %v527
        %784 = vst [vmem:[%s134 + $0x438] sm:$0xff] %v528
        %785 = vst [vmem:[%s134 + $0x440] sm:$0xff] %v529
        %786 = vst [vmem:[%s134 + $0x448] sm:$0xff] %v530
        %787 = vst [vmem:[%s134 + $0x450] sm:$0xff] %v531
        %788 = vst [vmem:[%s134 + $0x458] sm:$0xff] %v532
        %789 = vst [vmem:[%s134 + $0x460] sm:$0xff] %v533
        %790 = vst [vmem:[%s134 + $0x468] sm:$0xff] %v534
        %791 = vst [vmem:[%s134 + $0x470] sm:$0xff] %v535
        %792 = vst [vmem:[%s134 + $0x478] sm:$0xff] %v536
        %793 = vst [vmem:[%s134 + $0x480] sm:$0xff] %v537
        %794 = vst [vmem:[%s134 + $0x488] sm:$0xff] %v538
        %795 = vst [vmem:[%s134 + $0x490] sm:$0xff] %v539
        %796 = vst [vmem:[%s134 + $0x498] sm:$0xff] %v540
        %797 = vst [vmem:[%s134 + $0x4a0] sm:$0xff] %v541
        %798 = vst [vmem:[%s134 + $0x4a8] sm:$0xff] %v542
        %799 = vst [vmem:[%s134 + $0x4b0] sm:$0xff] %v543
        %800 = vst [vmem:[%s134 + $0x4b8] sm:$0xff] %v544
        %801 = vst [vmem:[%s134 + $0x4c0] sm:$0xff] %v545
        %802 = vst [vmem:[%s134 + $0x4c8] sm:$0xff] %v546
        %803 = vst [vmem:[%s134 + $0x4d0] sm:$0xff] %v547
        %804 = vst [vmem:[%s134 + $0x4d8] sm:$0xff] %v548
        %805 = vst [vmem:[%s134 + $0x4e0] sm:$0xff] %v549
        %806 = vst [vmem:[%s134 + $0x4e8] sm:$0xff] %v550
        %807 = vst [vmem:[%s134 + $0x4f0] sm:$0xff] %v551
        %808 = vst [vmem:[%s134 + $0x4f8] sm:$0xff] %v552
        %809 = vst [vmem:[%s134 + $0x500] sm:$0xff] %v553
        %810 = vst [vmem:[%s134 + $0x508] sm:$0xff] %v554
        %811 = vst [vmem:[%s134 + $0x510] sm:$0xff] %v555
        %812 = vst [vmem:[%s134 + $0x518] sm:$0xff] %v556
        %813 = vst [vmem:[%s134 + $0x520] sm:$0xff] %v557
        %814 = vst [vmem:[%s134 + $0x528] sm:$0xff] %v558
        %815 = vst [vmem:[%s134 + $0x530] sm:$0xff] %v559
        %816 = vst [vmem:[%s134 + $0x538] sm:$0xff] %v560
        %817 = vst [vmem:[%s134 + $0x540] sm:$0xff] %v561
        %818 = vst [vmem:[%s134 + $0x548] sm:$0xff] %v562
        %819 = vst [vmem:[%s134 + $0x550] sm:$0xff] %v563
        %820 = vst [vmem:[%s134 + $0x558] sm:$0xff] %v564
        %821 = vst [vmem:[%s134 + $0x560] sm:$0xff] %v565
        %822 = vst [vmem:[%s134 + $0x568] sm:$0xff] %v566
        %823 = vst [vmem:[%s134 + $0x570] sm:$0xff] %v567
        %824 = vst [vmem:[%s134 + $0x578] sm:$0xff] %v568
        %825 = vst [vmem:[%s134 + $0x580] sm:$0xff] %v569
        %826 = vst [vmem:[%s134 + $0x588] sm:$0xff] %v570
        %827 = vst [vmem:[%s134 + $0x590] sm:$0xff] %v571
        %828 = vst [vmem:[%s134 + $0x598] sm:$0xff] %v572
        %829 = vst [vmem:[%s134 + $0x5a0] sm:$0xff] %v573
        %830 = vst [vmem:[%s134 + $0x5a8] sm:$0xff] %v574
        %831 = vst [vmem:[%s134 + $0x5b0] sm:$0xff] %v575
        %832 = vst [vmem:[%s134 + $0x5b8] sm:$0xff] %v576
        %833 = vst [vmem:[%s134 + $0x5c0] sm:$0xff] %v577
        %834 = vst [vmem:[%s134 + $0x5c8] sm:$0xff] %v578
        %835 = vst [vmem:[%s134 + $0x5d0] sm:$0xff] %v579
        %836 = vst [vmem:[%s134 + $0x5d8] sm:$0xff] %v580
        %837 = vst [vmem:[%s134 + $0x5e0] sm:$0xff] %v581
        %838 = vst [vmem:[%s134 + $0x5e8] sm:$0xff] %v582
        %839 = vst [vmem:[%s134 + $0x5f0] sm:$0xff] %v583
        %840 = vst [vmem:[%s134 + $0x5f8] sm:$0xff] %v584
        %841 = vst [vmem:[%s134 + $0x600] sm:$0xff] %v585
        %842 = vst [vmem:[%s134 + $0x608] sm:$0xff] %v586
        %843 = vst [vmem:[%s134 + $0x610] sm:$0xff] %v587
        %844 = vst [vmem:[%s134 + $0x618] sm:$0xff] %v588
        %845 = vst [vmem:[%s134 + $0x620] sm:$0xff] %v589
        %846 = vst [vmem:[%s134 + $0x628] sm:$0xff] %v590
        %847 = vst [vmem:[%s134 + $0x630] sm:$0xff] %v591
        %848 = vst [vmem:[%s134 + $0x638] sm:$0xff] %v592
        %849 = vst [vmem:[%s134 + $0x640] sm:$0xff] %v593
        %850 = vst [vmem:[%s134 + $0x648] sm:$0xff] %v594
        %851 = vst [vmem:[%s134 + $0x650] sm:$0xff] %v595
        %852 = vst [vmem:[%s134 + $0x658] sm:$0xff] %v596
        %853 = vst [vmem:[%s134 + $0x660] sm:$0xff] %v597
        %854 = vst [vmem:[%s134 + $0x668] sm:$0xff] %v598
        %855 = vst [vmem:[%s134 + $0x670] sm:$0xff] %v599
        %856 = vst [vmem:[%s134 + $0x678] sm:$0xff] %v600
        %857 = vst [vmem:[%s134 + $0x680] sm:$0xff] %v601
        %858 = vst [vmem:[%s134 + $0x688] sm:$0xff] %v602
        %859 = vst [vmem:[%s134 + $0x690] sm:$0xff] %v603
        %860 = vst [vmem:[%s134 + $0x698] sm:$0xff] %v604
        %861 = vst [vmem:[%s134 + $0x6a0] sm:$0xff] %v605
        %862 = vst [vmem:[%s134 + $0x6a8] sm:$0xff] %v606
        %863 = vst [vmem:[%s134 + $0x6b0] sm:$0xff] %v607
        %864 = vst [vmem:[%s134 + $0x6b8] sm:$0xff] %v608
        %865 = vst [vmem:[%s134 + $0x6c0] sm:$0xff] %v609
        %866 = vst [vmem:[%s134 + $0x6c8] sm:$0xff] %v610
        %867 = vst [vmem:[%s134 + $0x6d0] sm:$0xff] %v611
        %868 = vst [vmem:[%s134 + $0x6d8] sm:$0xff] %v612
        %869 = vst [vmem:[%s134 + $0x6e0] sm:$0xff] %v613
        %870 = vst [vmem:[%s134 + $0x6e8] sm:$0xff] %v614
        %871 = vst [vmem:[%s134 + $0x6f0] sm:$0xff] %v615
        %872 = vst [vmem:[%s134 + $0x6f8] sm:$0xff] %v616
        %873 = vst [vmem:[%s134 + $0x700] sm:$0xff] %v617
        %874 = vst [vmem:[%s134 + $0x708] sm:$0xff] %v618
        %875 = vst [vmem:[%s134 + $0x710] sm:$0xff] %v619
        %876 = vst [vmem:[%s134 + $0x718] sm:$0xff] %v620
        %877 = vst [vmem:[%s134 + $0x720] sm:$0xff] %v621
        %878 = vst [vmem:[%s134 + $0x728] sm:$0xff] %v622
        %879 = vst [vmem:[%s134 + $0x730] sm:$0xff] %v623
        %880 = vst [vmem:[%s134 + $0x738] sm:$0xff] %v624
        %881 = vst [vmem:[%s134 + $0x740] sm:$0xff] %v625
        %882 = vst [vmem:[%s134 + $0x748] sm:$0xff] %v626
        %883 = vst [vmem:[%s134 + $0x750] sm:$0xff] %v627
        %884 = vst [vmem:[%s134 + $0x758] sm:$0xff] %v628
        %885 = vst [vmem:[%s134 + $0x760] sm:$0xff] %v629
        %886 = vst [vmem:[%s134 + $0x768] sm:$0xff] %v630
        %887 = vst [vmem:[%s134 + $0x770] sm:$0xff] %v631
        %888 = vst [vmem:[%s134 + $0x778] sm:$0xff] %v632
        %889 = vst [vmem:[%s134 + $0x780] sm:$0xff] %v633
        %890 = vst [vmem:[%s134 + $0x788] sm:$0xff] %v634
        %891 = vst [vmem:[%s134 + $0x790] sm:$0xff] %v635
        %892 = vst [vmem:[%s134 + $0x798] sm:$0xff] %v636
        %893 = vst [vmem:[%s134 + $0x7a0] sm:$0xff] %v637
        %894 = vst [vmem:[%s134 + $0x7a8] sm:$0xff] %v638
        %895 = vst [vmem:[%s134 + $0x7b0] sm:$0xff] %v639
        %896 = vst [vmem:[%s134 + $0x7b8] sm:$0xff] %v640
        %897 = vst [vmem:[%s134 + $0x7c0] sm:$0xff] %v641
        %898 = vst [vmem:[%s134 + $0x7c8] sm:$0xff] %v642
        %899 = vst [vmem:[%s134 + $0x7d0] sm:$0xff] %v643
        %900 = vst [vmem:[%s134 + $0x7d8] sm:$0xff] %v644
        %901 = vst [vmem:[%s134 + $0x7e0] sm:$0xff] %v645
        %902 = vst [vmem:[%s134 + $0x7e8] sm:$0xff] %v646
        %903 = vst [vmem:[%s134 + $0x7f0] sm:$0xff] %v647
        %904 = vst [vmem:[%s134 + $0x7f8] sm:$0xff] %v648
        %s905 = scalar_lea.vmem %s134, 2048 [#allocation5]
        %906 = vst [vmem:[%s905] sm:$0xff] %v393
        %907 = vst [vmem:[%s905 + $0x8] sm:$0xff] %v394
        %908 = vst [vmem:[%s905 + $0x10] sm:$0xff] %v395
        %909 = vst [vmem:[%s905 + $0x18] sm:$0xff] %v396
        %910 = vst [vmem:[%s905 + $0x20] sm:$0xff] %v397
        %911 = vst [vmem:[%s905 + $0x28] sm:$0xff] %v398
        %912 = vst [vmem:[%s905 + $0x30] sm:$0xff] %v399
        %913 = vst [vmem:[%s905 + $0x38] sm:$0xff] %v400
        %914 = vst [vmem:[%s905 + $0x40] sm:$0xff] %v401
        %915 = vst [vmem:[%s905 + $0x48] sm:$0xff] %v402
        %916 = vst [vmem:[%s905 + $0x50] sm:$0xff] %v403
        %917 = vst [vmem:[%s905 + $0x58] sm:$0xff] %v404
        %918 = vst [vmem:[%s905 + $0x60] sm:$0xff] %v405
        %919 = vst [vmem:[%s905 + $0x68] sm:$0xff] %v406
        %920 = vst [vmem:[%s905 + $0x70] sm:$0xff] %v407
        %921 = vst [vmem:[%s905 + $0x78] sm:$0xff] %v408
        %922 = vst [vmem:[%s905 + $0x80] sm:$0xff] %v409
        %923 = vst [vmem:[%s905 + $0x88] sm:$0xff] %v410
        %924 = vst [vmem:[%s905 + $0x90] sm:$0xff] %v411
        %925 = vst [vmem:[%s905 + $0x98] sm:$0xff] %v412
        %926 = vst [vmem:[%s905 + $0xa0] sm:$0xff] %v413
        %927 = vst [vmem:[%s905 + $0xa8] sm:$0xff] %v414
        %928 = vst [vmem:[%s905 + $0xb0] sm:$0xff] %v415
        %929 = vst [vmem:[%s905 + $0xb8] sm:$0xff] %v416
        %930 = vst [vmem:[%s905 + $0xc0] sm:$0xff] %v417
        %931 = vst [vmem:[%s905 + $0xc8] sm:$0xff] %v418
        %932 = vst [vmem:[%s905 + $0xd0] sm:$0xff] %v419
        %933 = vst [vmem:[%s905 + $0xd8] sm:$0xff] %v420
        %934 = vst [vmem:[%s905 + $0xe0] sm:$0xff] %v421
        %935 = vst [vmem:[%s905 + $0xe8] sm:$0xff] %v422
        %936 = vst [vmem:[%s905 + $0xf0] sm:$0xff] %v423
        %937 = vst [vmem:[%s905 + $0xf8] sm:$0xff] %v424
        %938 = vst [vmem:[%s905 + $0x100] sm:$0xff] %v425
        %939 = vst [vmem:[%s905 + $0x108] sm:$0xff] %v426
        %940 = vst [vmem:[%s905 + $0x110] sm:$0xff] %v427
        %941 = vst [vmem:[%s905 + $0x118] sm:$0xff] %v428
        %942 = vst [vmem:[%s905 + $0x120] sm:$0xff] %v429
        %943 = vst [vmem:[%s905 + $0x128] sm:$0xff] %v430
        %944 = vst [vmem:[%s905 + $0x130] sm:$0xff] %v431
        %945 = vst [vmem:[%s905 + $0x138] sm:$0xff] %v432
        %946 = vst [vmem:[%s905 + $0x140] sm:$0xff] %v433
        %947 = vst [vmem:[%s905 + $0x148] sm:$0xff] %v434
        %948 = vst [vmem:[%s905 + $0x150] sm:$0xff] %v435
        %949 = vst [vmem:[%s905 + $0x158] sm:$0xff] %v436
        %950 = vst [vmem:[%s905 + $0x160] sm:$0xff] %v437
        %951 = vst [vmem:[%s905 + $0x168] sm:$0xff] %v438
        %952 = vst [vmem:[%s905 + $0x170] sm:$0xff] %v439
        %953 = vst [vmem:[%s905 + $0x178] sm:$0xff] %v440
        %954 = vst [vmem:[%s905 + $0x180] sm:$0xff] %v441
        %955 = vst [vmem:[%s905 + $0x188] sm:$0xff] %v442
        %956 = vst [vmem:[%s905 + $0x190] sm:$0xff] %v443
        %957 = vst [vmem:[%s905 + $0x198] sm:$0xff] %v444
        %958 = vst [vmem:[%s905 + $0x1a0] sm:$0xff] %v445
        %959 = vst [vmem:[%s905 + $0x1a8] sm:$0xff] %v446
        %960 = vst [vmem:[%s905 + $0x1b0] sm:$0xff] %v447
        %961 = vst [vmem:[%s905 + $0x1b8] sm:$0xff] %v448
        %962 = vst [vmem:[%s905 + $0x1c0] sm:$0xff] %v449
        %963 = vst [vmem:[%s905 + $0x1c8] sm:$0xff] %v450
        %964 = vst [vmem:[%s905 + $0x1d0] sm:$0xff] %v451
        %965 = vst [vmem:[%s905 + $0x1d8] sm:$0xff] %v452
        %966 = vst [vmem:[%s905 + $0x1e0] sm:$0xff] %v453
        %967 = vst [vmem:[%s905 + $0x1e8] sm:$0xff] %v454
        %968 = vst [vmem:[%s905 + $0x1f0] sm:$0xff] %v455
        %969 = vst [vmem:[%s905 + $0x1f8] sm:$0xff] %v456
        %970 = vst [vmem:[%s905 + $0x200] sm:$0xff] %v457
        %971 = vst [vmem:[%s905 + $0x208] sm:$0xff] %v458
        %972 = vst [vmem:[%s905 + $0x210] sm:$0xff] %v459
        %973 = vst [vmem:[%s905 + $0x218] sm:$0xff] %v460
        %974 = vst [vmem:[%s905 + $0x220] sm:$0xff] %v461
        %975 = vst [vmem:[%s905 + $0x228] sm:$0xff] %v462
        %976 = vst [vmem:[%s905 + $0x230] sm:$0xff] %v463
        %977 = vst [vmem:[%s905 + $0x238] sm:$0xff] %v464
        %978 = vst [vmem:[%s905 + $0x240] sm:$0xff] %v465
        %979 = vst [vmem:[%s905 + $0x248] sm:$0xff] %v466
        %980 = vst [vmem:[%s905 + $0x250] sm:$0xff] %v467
        %981 = vst [vmem:[%s905 + $0x258] sm:$0xff] %v468
        %982 = vst [vmem:[%s905 + $0x260] sm:$0xff] %v469
        %983 = vst [vmem:[%s905 + $0x268] sm:$0xff] %v470
        %984 = vst [vmem:[%s905 + $0x270] sm:$0xff] %v471
        %985 = vst [vmem:[%s905 + $0x278] sm:$0xff] %v472
        %986 = vst [vmem:[%s905 + $0x280] sm:$0xff] %v473
        %987 = vst [vmem:[%s905 + $0x288] sm:$0xff] %v474
        %988 = vst [vmem:[%s905 + $0x290] sm:$0xff] %v475
        %989 = vst [vmem:[%s905 + $0x298] sm:$0xff] %v476
        %990 = vst [vmem:[%s905 + $0x2a0] sm:$0xff] %v477
        %991 = vst [vmem:[%s905 + $0x2a8] sm:$0xff] %v478
        %992 = vst [vmem:[%s905 + $0x2b0] sm:$0xff] %v479
        %993 = vst [vmem:[%s905 + $0x2b8] sm:$0xff] %v480
        %994 = vst [vmem:[%s905 + $0x2c0] sm:$0xff] %v481
        %995 = vst [vmem:[%s905 + $0x2c8] sm:$0xff] %v482
        %996 = vst [vmem:[%s905 + $0x2d0] sm:$0xff] %v483
        %997 = vst [vmem:[%s905 + $0x2d8] sm:$0xff] %v484
        %998 = vst [vmem:[%s905 + $0x2e0] sm:$0xff] %v485
        %999 = vst [vmem:[%s905 + $0x2e8] sm:$0xff] %v486
        %1000 = vst [vmem:[%s905 + $0x2f0] sm:$0xff] %v487
        %1001 = vst [vmem:[%s905 + $0x2f8] sm:$0xff] %v488
        %1002 = vst [vmem:[%s905 + $0x300] sm:$0xff] %v489
        %1003 = vst [vmem:[%s905 + $0x308] sm:$0xff] %v490
        %1004 = vst [vmem:[%s905 + $0x310] sm:$0xff] %v491
        %1005 = vst [vmem:[%s905 + $0x318] sm:$0xff] %v492
        %1006 = vst [vmem:[%s905 + $0x320] sm:$0xff] %v493
        %1007 = vst [vmem:[%s905 + $0x328] sm:$0xff] %v494
        %1008 = vst [vmem:[%s905 + $0x330] sm:$0xff] %v495
        %1009 = vst [vmem:[%s905 + $0x338] sm:$0xff] %v496
        %1010 = vst [vmem:[%s905 + $0x340] sm:$0xff] %v497
        %1011 = vst [vmem:[%s905 + $0x348] sm:$0xff] %v498
        %1012 = vst [vmem:[%s905 + $0x350] sm:$0xff] %v499
        %1013 = vst [vmem:[%s905 + $0x358] sm:$0xff] %v500
        %1014 = vst [vmem:[%s905 + $0x360] sm:$0xff] %v501
        %1015 = vst [vmem:[%s905 + $0x368] sm:$0xff] %v502
        %1016 = vst [vmem:[%s905 + $0x370] sm:$0xff] %v503
        %1017 = vst [vmem:[%s905 + $0x378] sm:$0xff] %v504
        %1018 = vst [vmem:[%s905 + $0x380] sm:$0xff] %v505
        %1019 = vst [vmem:[%s905 + $0x388] sm:$0xff] %v506
        %1020 = vst [vmem:[%s905 + $0x390] sm:$0xff] %v507
        %1021 = vst [vmem:[%s905 + $0x398] sm:$0xff] %v508
        %1022 = vst [vmem:[%s905 + $0x3a0] sm:$0xff] %v509
        %1023 = vst [vmem:[%s905 + $0x3a8] sm:$0xff] %v510
        %1024 = vst [vmem:[%s905 + $0x3b0] sm:$0xff] %v511
        %1025 = vst [vmem:[%s905 + $0x3b8] sm:$0xff] %v512
        %1026 = vst [vmem:[%s905 + $0x3c0] sm:$0xff] %v513
        %1027 = vst [vmem:[%s905 + $0x3c8] sm:$0xff] %v514
        %1028 = vst [vmem:[%s905 + $0x3d0] sm:$0xff] %v515
        %1029 = vst [vmem:[%s905 + $0x3d8] sm:$0xff] %v516
        %1030 = vst [vmem:[%s905 + $0x3e0] sm:$0xff] %v517
        %1031 = vst [vmem:[%s905 + $0x3e8] sm:$0xff] %v518
        %1032 = vst [vmem:[%s905 + $0x3f0] sm:$0xff] %v519
        %1033 = vst [vmem:[%s905 + $0x3f8] sm:$0xff] %v520
        %1034 = vst [vmem:[%s905 + $0x400] sm:$0xff] %v521
        %1035 = vst [vmem:[%s905 + $0x408] sm:$0xff] %v522
        %1036 = vst [vmem:[%s905 + $0x410] sm:$0xff] %v523
        %1037 = vst [vmem:[%s905 + $0x418] sm:$0xff] %v524
        %1038 = vst [vmem:[%s905 + $0x420] sm:$0xff] %v525
        %1039 = vst [vmem:[%s905 + $0x428] sm:$0xff] %v526
        %1040 = vst [vmem:[%s905 + $0x430] sm:$0xff] %v527
        %1041 = vst [vmem:[%s905 + $0x438] sm:$0xff] %v528
        %1042 = vst [vmem:[%s905 + $0x440] sm:$0xff] %v529
        %1043 = vst [vmem:[%s905 + $0x448] sm:$0xff] %v530
        %1044 = vst [vmem:[%s905 + $0x450] sm:$0xff] %v531
        %1045 = vst [vmem:[%s905 + $0x458] sm:$0xff] %v532
        %1046 = vst [vmem:[%s905 + $0x460] sm:$0xff] %v533
        %1047 = vst [vmem:[%s905 + $0x468] sm:$0xff] %v534
        %1048 = vst [vmem:[%s905 + $0x470] sm:$0xff] %v535
        %1049 = vst [vmem:[%s905 + $0x478] sm:$0xff] %v536
        %1050 = vst [vmem:[%s905 + $0x480] sm:$0xff] %v537
        %1051 = vst [vmem:[%s905 + $0x488] sm:$0xff] %v538
        %1052 = vst [vmem:[%s905 + $0x490] sm:$0xff] %v539
        %1053 = vst [vmem:[%s905 + $0x498] sm:$0xff] %v540
        %1054 = vst [vmem:[%s905 + $0x4a0] sm:$0xff] %v541
        %1055 = vst [vmem:[%s905 + $0x4a8] sm:$0xff] %v542
        %1056 = vst [vmem:[%s905 + $0x4b0] sm:$0xff] %v543
        %1057 = vst [vmem:[%s905 + $0x4b8] sm:$0xff] %v544
        %1058 = vst [vmem:[%s905 + $0x4c0] sm:$0xff] %v545
        %1059 = vst [vmem:[%s905 + $0x4c8] sm:$0xff] %v546
        %1060 = vst [vmem:[%s905 + $0x4d0] sm:$0xff] %v547
        %1061 = vst [vmem:[%s905 + $0x4d8] sm:$0xff] %v548
        %1062 = vst [vmem:[%s905 + $0x4e0] sm:$0xff] %v549
        %1063 = vst [vmem:[%s905 + $0x4e8] sm:$0xff] %v550
        %1064 = vst [vmem:[%s905 + $0x4f0] sm:$0xff] %v551
        %1065 = vst [vmem:[%s905 + $0x4f8] sm:$0xff] %v552
        %1066 = vst [vmem:[%s905 + $0x500] sm:$0xff] %v553
        %1067 = vst [vmem:[%s905 + $0x508] sm:$0xff] %v554
        %1068 = vst [vmem:[%s905 + $0x510] sm:$0xff] %v555
        %1069 = vst [vmem:[%s905 + $0x518] sm:$0xff] %v556
        %1070 = vst [vmem:[%s905 + $0x520] sm:$0xff] %v557
        %1071 = vst [vmem:[%s905 + $0x528] sm:$0xff] %v558
        %1072 = vst [vmem:[%s905 + $0x530] sm:$0xff] %v559
        %1073 = vst [vmem:[%s905 + $0x538] sm:$0xff] %v560
        %1074 = vst [vmem:[%s905 + $0x540] sm:$0xff] %v561
        %1075 = vst [vmem:[%s905 + $0x548] sm:$0xff] %v562
        %1076 = vst [vmem:[%s905 + $0x550] sm:$0xff] %v563
        %1077 = vst [vmem:[%s905 + $0x558] sm:$0xff] %v564
        %1078 = vst [vmem:[%s905 + $0x560] sm:$0xff] %v565
        %1079 = vst [vmem:[%s905 + $0x568] sm:$0xff] %v566
        %1080 = vst [vmem:[%s905 + $0x570] sm:$0xff] %v567
        %1081 = vst [vmem:[%s905 + $0x578] sm:$0xff] %v568
        %1082 = vst [vmem:[%s905 + $0x580] sm:$0xff] %v569
        %1083 = vst [vmem:[%s905 + $0x588] sm:$0xff] %v570
        %1084 = vst [vmem:[%s905 + $0x590] sm:$0xff] %v571
        %1085 = vst [vmem:[%s905 + $0x598] sm:$0xff] %v572
        %1086 = vst [vmem:[%s905 + $0x5a0] sm:$0xff] %v573
        %1087 = vst [vmem:[%s905 + $0x5a8] sm:$0xff] %v574
        %1088 = vst [vmem:[%s905 + $0x5b0] sm:$0xff] %v575
        %1089 = vst [vmem:[%s905 + $0x5b8] sm:$0xff] %v576
        %1090 = vst [vmem:[%s905 + $0x5c0] sm:$0xff] %v577
        %1091 = vst [vmem:[%s905 + $0x5c8] sm:$0xff] %v578
        %1092 = vst [vmem:[%s905 + $0x5d0] sm:$0xff] %v579
        %1093 = vst [vmem:[%s905 + $0x5d8] sm:$0xff] %v580
        %1094 = vst [vmem:[%s905 + $0x5e0] sm:$0xff] %v581
        %1095 = vst [vmem:[%s905 + $0x5e8] sm:$0xff] %v582
        %1096 = vst [vmem:[%s905 + $0x5f0] sm:$0xff] %v583
        %1097 = vst [vmem:[%s905 + $0x5f8] sm:$0xff] %v584
        %1098 = vst [vmem:[%s905 + $0x600] sm:$0xff] %v585
        %1099 = vst [vmem:[%s905 + $0x608] sm:$0xff] %v586
        %1100 = vst [vmem:[%s905 + $0x610] sm:$0xff] %v587
        %1101 = vst [vmem:[%s905 + $0x618] sm:$0xff] %v588
        %1102 = vst [vmem:[%s905 + $0x620] sm:$0xff] %v589
        %1103 = vst [vmem:[%s905 + $0x628] sm:$0xff] %v590
        %1104 = vst [vmem:[%s905 + $0x630] sm:$0xff] %v591
        %1105 = vst [vmem:[%s905 + $0x638] sm:$0xff] %v592
        %1106 = vst [vmem:[%s905 + $0x640] sm:$0xff] %v593
        %1107 = vst [vmem:[%s905 + $0x648] sm:$0xff] %v594
        %1108 = vst [vmem:[%s905 + $0x650] sm:$0xff] %v595
        %1109 = vst [vmem:[%s905 + $0x658] sm:$0xff] %v596
        %1110 = vst [vmem:[%s905 + $0x660] sm:$0xff] %v597
        %1111 = vst [vmem:[%s905 + $0x668] sm:$0xff] %v598
        %1112 = vst [vmem:[%s905 + $0x670] sm:$0xff] %v599
        %1113 = vst [vmem:[%s905 + $0x678] sm:$0xff] %v600
        %1114 = vst [vmem:[%s905 + $0x680] sm:$0xff] %v601
        %1115 = vst [vmem:[%s905 + $0x688] sm:$0xff] %v602
        %1116 = vst [vmem:[%s905 + $0x690] sm:$0xff] %v603
        %1117 = vst [vmem:[%s905 + $0x698] sm:$0xff] %v604
        %1118 = vst [vmem:[%s905 + $0x6a0] sm:$0xff] %v605
        %1119 = vst [vmem:[%s905 + $0x6a8] sm:$0xff] %v606
        %1120 = vst [vmem:[%s905 + $0x6b0] sm:$0xff] %v607
        %1121 = vst [vmem:[%s905 + $0x6b8] sm:$0xff] %v608
        %1122 = vst [vmem:[%s905 + $0x6c0] sm:$0xff] %v609
        %1123 = vst [vmem:[%s905 + $0x6c8] sm:$0xff] %v610
        %1124 = vst [vmem:[%s905 + $0x6d0] sm:$0xff] %v611
        %1125 = vst [vmem:[%s905 + $0x6d8] sm:$0xff] %v612
        %1126 = vst [vmem:[%s905 + $0x6e0] sm:$0xff] %v613
        %1127 = vst [vmem:[%s905 + $0x6e8] sm:$0xff] %v614
        %1128 = vst [vmem:[%s905 + $0x6f0] sm:$0xff] %v615
        %1129 = vst [vmem:[%s905 + $0x6f8] sm:$0xff] %v616
        %1130 = vst [vmem:[%s905 + $0x700] sm:$0xff] %v617
        %1131 = vst [vmem:[%s905 + $0x708] sm:$0xff] %v618
        %1132 = vst [vmem:[%s905 + $0x710] sm:$0xff] %v619
        %1133 = vst [vmem:[%s905 + $0x718] sm:$0xff] %v620
        %1134 = vst [vmem:[%s905 + $0x720] sm:$0xff] %v621
        %1135 = vst [vmem:[%s905 + $0x728] sm:$0xff] %v622
        %1136 = vst [vmem:[%s905 + $0x730] sm:$0xff] %v623
        %1137 = vst [vmem:[%s905 + $0x738] sm:$0xff] %v624
        %1138 = vst [vmem:[%s905 + $0x740] sm:$0xff] %v625
        %1139 = vst [vmem:[%s905 + $0x748] sm:$0xff] %v626
        %1140 = vst [vmem:[%s905 + $0x750] sm:$0xff] %v627
        %1141 = vst [vmem:[%s905 + $0x758] sm:$0xff] %v628
        %1142 = vst [vmem:[%s905 + $0x760] sm:$0xff] %v629
        %1143 = vst [vmem:[%s905 + $0x768] sm:$0xff] %v630
        %1144 = vst [vmem:[%s905 + $0x770] sm:$0xff] %v631
        %1145 = vst [vmem:[%s905 + $0x778] sm:$0xff] %v632
        %1146 = vst [vmem:[%s905 + $0x780] sm:$0xff] %v633
        %1147 = vst [vmem:[%s905 + $0x788] sm:$0xff] %v634
        %1148 = vst [vmem:[%s905 + $0x790] sm:$0xff] %v635
        %1149 = vst [vmem:[%s905 + $0x798] sm:$0xff] %v636
        %1150 = vst [vmem:[%s905 + $0x7a0] sm:$0xff] %v637
        %1151 = vst [vmem:[%s905 + $0x7a8] sm:$0xff] %v638
        %1152 = vst [vmem:[%s905 + $0x7b0] sm:$0xff] %v639
        %1153 = vst [vmem:[%s905 + $0x7b8] sm:$0xff] %v640
        %1154 = vst [vmem:[%s905 + $0x7c0] sm:$0xff] %v641
        %1155 = vst [vmem:[%s905 + $0x7c8] sm:$0xff] %v642
        %1156 = vst [vmem:[%s905 + $0x7d0] sm:$0xff] %v643
        %1157 = vst [vmem:[%s905 + $0x7d8] sm:$0xff] %v644
        %1158 = vst [vmem:[%s905 + $0x7e0] sm:$0xff] %v645
        %1159 = vst [vmem:[%s905 + $0x7e8] sm:$0xff] %v646
        %1160 = vst [vmem:[%s905 + $0x7f0] sm:$0xff] %v647
        %1161 = vst [vmem:[%s905 + $0x7f8] sm:$0xff] %v648
        %s1162 = sand.u32 %s52, 1
        %s1163 = scalar_lea.sflag [#allocation4], %s1162
        %s1164 = sand.u32 %s52, 1
        %s1165 = smul.addr %s1164, 4096
        %s1166 = scalar_lea.vmem [#allocation5], %s1165
        // Predicated region
        $region29: #{tpu_custom_call.1} parent=23 // pred_check
          %p1167 = pneg %p62
        $region30: #{tpu_custom_call.1} parent=23 // pred_check_branch
          %1169 = sbr.rel (%p1167) target = $region32
        $region31: #{tpu_custom_call.1} parent=23 // pred_region
          #allocation7 [shape = 'u32[6]{0}', space=smem, size = 0x18, scoped, tag = 'DMA stride descriptor']
          %s1170 = smul.u32 256, %s18
          %s1172 = ssub.s32 65536, 65536
          %1173 = vsyncadd %s1163, %s1172
          %s1174 = smul.addr %s1170, 128
          %s1175 = scalar_lea.hbm %s1, %s1174
          %s1177 = sshll.u32 1, 14
          %s1178 = sxor.u32 4294967295, %s1177
          %s1181 = sshll.u32 7, 18
          %s1182 = sxor.u32 4294967295, %s1181
          %s1183 = sand.u32 0, %s1182
          %s1185 = sor.u32 %s1183, 0
          %s1187 = sshll.u32 3, 24
          %s1188 = sxor.u32 4294967295, %s1187
          %s1189 = sand.u32 %s1185, %s1188
          %s1191 = sor.u32 %s1189, 0
          %s1192 = sshll.u32 %s1166, 4
          %s1193 = int_to_ptr.vmem [resolvable:$true] %s1192
          %1199 = sst [smem:[#allocation7]] 32768
          %s1200 = scalar_lea.smem [#allocation7], 1
          %1201 = sst [smem:[%s1200]] 65536
          %s1202 = scalar_lea.smem [#allocation7], 2
          %1203 = sst [smem:[%s1202]] 256
          %s1204 = scalar_lea.smem [#allocation7], 3
          %1205 = sst [smem:[%s1204]] 128
          %s1206 = scalar_lea.smem [#allocation7], 4
          %1207 = sst [smem:[%s1206]] 128
          %s1208 = scalar_lea.smem [#allocation7], 5
          %1209 = sst [smem:[%s1208]] 8
          %1211 = dma.general %s1193, 65536, %s1175, %s1163, [#allocation6], [#allocation7], %s1191, 0
        $region32: #{tpu_custom_call.1} parent=23 // pred_fallthru
          _
      $region24: #{tpu_custom_call.1} parent=5 // pred_fallthru
        _
      %p1212 = scmp.le.s32.totalorder 2, %s13
      // Predicated region
      $region33: #{tpu_custom_call.1} parent=5 // pred_check
        %p1213 = pneg %p1212
      $region34: #{tpu_custom_call.1} parent=5 // pred_check_branch
        %1215 = sbr.rel (%p1213) target = $region36
      $region35: #{tpu_custom_call.1} parent=5 // pred_region
        %s1216 = ssub.s32 %s13, 2
        // Predicated region
        $region37: #{tpu_custom_call.1} parent=35 // pred_check
          %p1217 = pneg %p68
        $region38: #{tpu_custom_call.1} parent=35 // pred_check_branch
          %1219 = sbr.rel (%p1217) target = $region40
        $region39: #{tpu_custom_call.1} parent=35 // pred_region
          %s1220 = sand.u32 %s53, 1
          %s1221 = scalar_lea.sflag [#allocation4], %s1220
          %s1222 = sand.u32 %s53, 1
          %s1223 = smul.addr %s1222, 4096
          %s1224 = scalar_lea.vmem [#allocation5], %s1223
          %1225 = dma.done %s1221, 65536
        $region40: #{tpu_custom_call.1} parent=35 // pred_fallthru
          _
      $region36: #{tpu_custom_call.1} parent=5 // pred_fallthru
        _
    $region6: #{tpu_custom_call.1} parent=1 // loop_footer
      %s17 = sadd.s32 1, %s13
    $region7: #{tpu_custom_call.1} parent=1 // loop_footer_branch
      %12 = sbr.rel target = $region3
    $region8: #{tpu_custom_call.1} parent=1 // loop_exit
      _
    %1226 = vsyncpa [#allocation3], 1
    %s1227 = scalar_lea.sflag [#allocation3], 1
    %1228 = vsyncpa %s1227, 1
    %1229 = vsyncpa [#allocation4], 1
    %s1230 = scalar_lea.sflag [#allocation4], 1
    %1231 = vsyncpa %s1230, 1

</llo_original>
